<compile_context>
chip_gen: v6e
topology: v6e:2x2x1
jax: 0.10.0
libtpu: 0.0.40
codegen_flags: <defaults>
</compile_context>

<pallas_src>
import jax
import jax.numpy as jnp
from jax.experimental import pallas as pl
from jax.experimental.pallas import tpu as pltpu

_LANE = 128
# Per-buffer block cap.  With double buffering on both input and output this
# is ~4x in VMEM — comfortably inside every generation's default scoped VMEM.
_BLOCK_BYTES = 4 * 1024 * 1024


def _identity_kernel(x_ref, o_ref):
    # Pure pass-through: load the tile, store it back out.
    o_ref[...] = x_ref[...]


def _lane_dense_layout(total_elems):
    """Pick a lane-dense 2D layout (rows, lanes) for `total_elems` elements.

    Returns (rows, lanes, pad) where `pad` is the number of trailing padding
    elements needed so that rows * lanes == total_elems + pad.
    """
    for lanes in (4096, 2048, 1024, 512, 256, _LANE):
        if total_elems % lanes == 0:
            return total_elems // lanes, lanes, 0
    padded = pl.cdiv(total_elems, _LANE) * _LANE
    return padded // _LANE, _LANE, padded - total_elems


def _block_rows(rows, lanes, itemsize):
    """Largest row-block that keeps one buffer under _BLOCK_BYTES.

    Must be a multiple of 8 (sublane tiling) unless it equals the full extent.
    """
    if rows <= 8:
        return rows  # full-extent block is always legal
    target = max(8, (_BLOCK_BYTES // (lanes * itemsize)) // 8 * 8)
    return rows if target >= rows else target


def print_tensors(x, name="tensor", verbose=False, donate=False):
    """Pallas equivalent of PrintTensors.forward.

    If `verbose`, prints the name and (static) size host-side — note that
    under jit this fires once per compilation, not per execution (use
    pl.debug_print inside the kernel if per-call printing is required).
    Returns X unchanged via a tiled, lane-dense identity Pallas kernel.
    """
    if verbose:
        print(f"Name: {name}, Size: {tuple(x.shape)}")

    total = x.size
    if total == 0:
        return x  # nothing to copy

    itemsize = jnp.dtype(x.dtype).itemsize
    rows, lanes, pad = _lane_dense_layout(total)
    br = _block_rows(rows, lanes, itemsize)

    # Wrapper-side layout plumbing: flatten (free for contiguous NCHW) and,
    # only if needed, pad so the last dim is a multiple of 128.
    flat = x.reshape(-1)
    if pad:
        flat = jnp.pad(flat, (0, pad))
    x2d = flat.reshape(rows, lanes)

    extra_kwargs = {}
    if donate:
        # Inside a jit-ted pipeline with buffer donation this lets XLA alias
        # the output onto the input and skip the second HBM allocation.
        extra_kwargs["input_output_aliases"] = {0: 0}

    y2d = pl.pallas_call(
        _identity_kernel,
        out_shape=jax.ShapeDtypeStruct((rows, lanes), x.dtype),
        grid=(pl.cdiv(rows, br),),
        in_specs=[pl.BlockSpec((br, lanes), lambda i: (i, 0))],
        out_specs=pl.BlockSpec((br, lanes), lambda i: (i, 0)),
        compiler_params=pltpu.CompilerParams(
            dimension_semantics=("parallel",),
        ),
        cost_estimate=pl.CostEstimate(
            flops=0,
            transcendentals=0,
            bytes_accessed=2 * rows * lanes * itemsize,
        ),
        **extra_kwargs,
    )(x2d)

    y = y2d.reshape(-1)
    if pad:
        y = y[:total]
    return y.reshape(x.shape)


if __name__ == "__main__":
    key = jax.random.PRNGKey(0)
    # Small NCHW input consistent with typical conv-pipeline usage.
    x = jax.random.normal(key, (2, 4, 16, 16), dtype=jnp.float32)

    y = print_tensors(x, name="debug_point", verbose=False)
    y = jax.block_until_ready(y)

    assert y.shape == x.shape and y.dtype == x.dtype
    assert bool(jnp.all(y == x))
    print("KERNEL_OK")
</pallas_src>

<mosaic_0001>
module attributes {stable_mosaic.version = 11 : i64} {
  func.func @_identity_kernel(%arg0: i32, %arg1: memref<1x2048xf32, #tpu.memory_space<vmem>>, %arg2: memref<1x2048xf32, #tpu.memory_space<vmem>>) attributes {dimension_semantics = [#tpu.dimension_semantics<parallel>], iteration_bounds = array<i64: 1>, scalar_prefetch = 0 : i64, scratch_operands = 0 : i64, tpu.core_type = #tpu.core_type<tc>, window_params = [{transform_indices = @transform_0, window_bounds = array<i64: 1, 2048>}, {transform_indices = @transform_1, window_bounds = array<i64: 1, 2048>}]} {
    %c0 = arith.constant 0 : index
    %c0_0 = arith.constant 0 : index
    %0 = vector.load %arg1[%c0, %c0_0] : memref<1x2048xf32, #tpu.memory_space<vmem>>, vector<1x2048xf32>
    %c0_1 = arith.constant 0 : index
    %c0_2 = arith.constant 0 : index
    %1 = vector.load %arg2[%c0_1, %c0_2] : memref<1x2048xf32, #tpu.memory_space<vmem>>, vector<1x2048xf32>
    tpu.vector_store %arg2[%c0_1, %c0_2], %0 {strides = array<i32>} : memref<1x2048xf32, #tpu.memory_space<vmem>>, vector<1x2048xf32>,
    return
  }
  func.func @transform_0(%arg0: i32) -> (i32, i32) {
    %c0_i32 = arith.constant 0 : i32
    %c0_i32_0 = arith.constant 0 : i32
    return %arg0, %c0_i32 : i32, i32
  }
  func.func @transform_1(%arg0: i32) -> (i32, i32) {
    %c0_i32 = arith.constant 0 : i32
    %c0_i32_0 = arith.constant 0 : i32
    return %arg0, %c0_i32 : i32, i32
  }
}

</mosaic_0001>

<llo_original>
// kernel: tpu_custom_call.1
$region0: #{tpu_custom_call.1}
  #allocation0 [shape = 'u32[]', space=smem, size = 0x4, offset = 0x4, fixed_abs, tag = 'smem constant byte address 0x4 - core index']
  #allocation1 [shape = 'u32[144,128]{1,0:T(1,128)}', space=vmem, size = 0x12000, scoped, tag = 'internal scratch']
  %s0 = inlined_call_operand.hbm [shape: f32[1,2048], index: 0, kind: input, shape index: {}]
  %s1 = inlined_call_operand.hbm [shape: f32[1,2048], index: 1, kind: output, shape index: {}]
  %s2 = sld [smem:[#allocation0]]
  $region18: #{tpu_custom_call.1} parent=0
    _
  %s4 = ssub.s32 1, %s2
  %s5 = scalar_select 0, %s4, %s2
  $region1: #{tpu_custom_call.1} parent=0
    #allocation2 [shape = 'u8[8192]{0}', space=vmem, size = 0x2000, scoped, tag = 'input window, operand 0, single buffered']
    #allocation3 [shape = 's32[1]{0}', space=sflag, size = 0x4, scoped, tag = 'scoped memory for tpu_custom_call.1']
    #allocation4 [shape = 's32[1]{0}', space=sflag, size = 0x4, scoped, tag = 'scoped memory for tpu_custom_call.1']
    #allocation5 [shape = 'u8[8192]{0}', space=vmem, size = 0x2000, scoped, tag = 'output window, operand 0, single buffered']
    %6 = vsyncpa [#allocation3], 0
    %7 = vsyncpa [#allocation4], 0
    // Predicated region
    $region2: #{tpu_custom_call.1} parent=1 // pred_check
      _
    $region3: #{tpu_custom_call.1} parent=1 // pred_check_branch
      %9 = sbr.rel (0) target = $region5
    $region4: #{tpu_custom_call.1} parent=1 // pred_region
      %s11 = ssub.s32 256, 256
      %12 = vsyncadd [#allocation3], %s11
      %s14 = sshll.u32 [#allocation2], 4
      %s15 = int_to_ptr.vmem [resolvable:$true] %s14
      %17 = dma.hbm_to_vmem [thread:$0]  %s0, 256, %s15, [#allocation3]
    $region5: #{tpu_custom_call.1} parent=1 // pred_fallthru
      _
    // Predicated region
    $region6: #{tpu_custom_call.1} parent=1 // pred_check
      _
    $region7: #{tpu_custom_call.1} parent=1 // pred_check_branch
      %19 = sbr.rel (0) target = $region9
    $region8: #{tpu_custom_call.1} parent=1 // pred_region
      %20 = dma.done [#allocation3], 256
    $region9: #{tpu_custom_call.1} parent=1 // pred_fallthru
      _
    %v21 = vld [vmem:[#allocation2] sm:$0xff]
    %v22 = vld [vmem:[#allocation2 + $0x8] sm:$0xff]
    %23 = vst [vmem:[#allocation5] sm:$0xff] %v21
    %24 = vst [vmem:[#allocation5 + $0x8] sm:$0xff] %v22
    // Predicated region
    $region10: #{tpu_custom_call.1} parent=1 // pred_check
      _
    $region11: #{tpu_custom_call.1} parent=1 // pred_check_branch
      %26 = sbr.rel (0) target = $region13
    $region12: #{tpu_custom_call.1} parent=1 // pred_region
      %s28 = ssub.s32 256, 256
      %29 = vsyncadd [#allocation4], %s28
      %s31 = sshll.u32 [#allocation5], 4
      %s32 = int_to_ptr.vmem [resolvable:$true] %s31
      %34 = dma.vmem_to_hbm [thread:$0]  %s32, 256, %s1, [#allocation4]
    $region13: #{tpu_custom_call.1} parent=1 // pred_fallthru
      _
    // Predicated region
    $region14: #{tpu_custom_call.1} parent=1 // pred_check
      _
    $region15: #{tpu_custom_call.1} parent=1 // pred_check_branch
      %36 = sbr.rel (0) target = $region17
    $region16: #{tpu_custom_call.1} parent=1 // pred_region
      %37 = dma.done [#allocation4], 256
    $region17: #{tpu_custom_call.1} parent=1 // pred_fallthru
      _
    %38 = vsyncpa [#allocation3], 1
    %39 = vsyncpa [#allocation4], 1

</llo_original>
